<compile_context>
chip_gen: v7x
topology: tpu7x:2x2x1
jax: 0.10.0
libtpu: 0.0.40
codegen_flags: <defaults>
</compile_context>

<pallas_src>
import functools

import jax
import jax.numpy as jnp
from jax.experimental import pallas as pl
from jax.experimental.pallas import tpu as pltpu

SUBLANE = 16   # bf16 packs 2 rows per sublane; 16-aligned batch tiles stay dense.
LANE = 128


def _round_up(n: int, m: int) -> int:
    return ((n + m - 1) // m) * m


# ---------------------------------------------------------------------------
# Kernels
# ---------------------------------------------------------------------------
def _mlp_q(x_ref, w1_ref, b1_ref, w2_ref, b2_ref, w3_ref, b3_ref):
    """Shared fused MLP body. Returns f32 Q-values of shape (TB, out_pad)."""
    # f32 load, in-kernel bf16 cast (no separate wrapper cast pass over HBM).
    x = x_ref[...].astype(jnp.bfloat16)

    # Layer 1: bf16 MXU matmul, f32 accumulate, f32 bias + ReLU, bf16 handoff.
    h1 = jnp.dot(x, w1_ref[...], preferred_element_type=jnp.float32) + b1_ref[...]
    h1 = jnp.maximum(h1, 0.0).astype(jnp.bfloat16)

    # Layer 2.
    h2 = jnp.dot(h1, w2_ref[...], preferred_element_type=jnp.float32) + b2_ref[...]
    h2 = jnp.maximum(h2, 0.0).astype(jnp.bfloat16)

    # Layer 3 (no activation).
    return jnp.dot(h2, w3_ref[...], preferred_element_type=jnp.float32) + b3_ref[...]


def dqn_kernel(x_ref, w1_ref, b1_ref, w2_ref, b2_ref, w3_ref, b3_ref, o_ref):
    """Fused forward pass for one batch tile; bf16 lane-dense output store."""
    q = _mlp_q(x_ref, w1_ref, b1_ref, w2_ref, b2_ref, w3_ref, b3_ref)
    o_ref[...] = q.astype(o_ref.dtype)          # bf16 store: half the HBM writeback


def dqn_act_kernel(x_ref, w1_ref, b1_ref, w2_ref, b2_ref, w3_ref, b3_ref, a_ref,
                   *, output_dim):
    """Fused forward + greedy argmax over the valid actions -> (TB, 1) int32."""
    q = _mlp_q(x_ref, w1_ref, b1_ref, w2_ref, b2_ref, w3_ref, b3_ref)
    out_pad = q.shape[-1]
    col = jax.lax.broadcasted_iota(jnp.int32, q.shape, 1)
    q = jnp.where(col < output_dim, q, -jnp.inf)          # mask padded lanes
    qmax = jnp.max(q, axis=-1, keepdims=True)             # XLU lane reduction
    colf = col.astype(jnp.float32)
    first = jnp.min(jnp.where(q >= qmax, colf, jnp.float32(out_pad)),
                    axis=-1, keepdims=True)               # first index of the max
    a_ref[...] = first.astype(jnp.int32)


# ---------------------------------------------------------------------------
# One-time parameter preparation (transpose / pad / cast hoisted out of forward)
# ---------------------------------------------------------------------------
def prepare_dqn_params(params, lane_pad: int = LANE):
    """Convert PyTorch-convention params into kernel operands (done once).

    params: dict with w1 (128, in), b1 (128,), w2 (128, 128), b2 (128,),
            w3 (out, 128), b3 (out,)  -- nn.Linear convention.
    Returns (kernel_params_dict, output_dim).
    """
    hidden = params["w1"].shape[0]
    output_dim = params["w3"].shape[0]
    out_pad = _round_up(output_dim, lane_pad)

    w1t = jnp.asarray(params["w1"], jnp.float32).T.astype(jnp.bfloat16)
    w2t = jnp.asarray(params["w2"], jnp.float32).T.astype(jnp.bfloat16)
    w3t_valid = jnp.asarray(params["w3"], jnp.float32).T.astype(jnp.bfloat16)
    w3t = jnp.zeros((hidden, out_pad), jnp.bfloat16).at[:, :output_dim].set(w3t_valid)

    b1 = jnp.asarray(params["b1"], jnp.float32).reshape(1, hidden)
    b2 = jnp.asarray(params["b2"], jnp.float32).reshape(1, hidden)
    b3 = jnp.zeros((1, out_pad), jnp.float32).at[:, :output_dim].set(
        jnp.asarray(params["b3"], jnp.float32).reshape(1, output_dim)
    )

    kp = {"w1t": w1t, "b1": b1, "w2t": w2t, "b2": b2, "w3t": w3t, "b3": b3}
    return kp, output_dim


# ---------------------------------------------------------------------------
# Wrappers
# ---------------------------------------------------------------------------
def _pick_tile(B: int, batch_tile: int) -> int:
    # One tile for the whole batch whenever it fits in batch_tile (fewest grid
    # steps); otherwise big batch_tile-row tiles. Always 16-row aligned.
    return _round_up(min(batch_tile, _round_up(B, SUBLANE)), SUBLANE)


def _dqn_in_specs(tb, input_dim, hidden, out_pad):
    return [
        # batch tile of the input (f32, cast to bf16 inside the kernel)
        pl.BlockSpec((tb, input_dim), lambda i: (i, 0)),
        # weights / biases: grid-invariant index_maps -> resident across steps
        pl.BlockSpec((input_dim, hidden), lambda i: (0, 0)),
        pl.BlockSpec((1, hidden), lambda i: (0, 0)),
        pl.BlockSpec((hidden, hidden), lambda i: (0, 0)),
        pl.BlockSpec((1, hidden), lambda i: (0, 0)),
        pl.BlockSpec((hidden, out_pad), lambda i: (0, 0)),
        pl.BlockSpec((1, out_pad), lambda i: (0, 0)),
    ]


@functools.partial(jax.jit, static_argnames=("output_dim", "batch_tile"))
def dqn_forward(x, kernel_params, output_dim, batch_tile=1024):
    """Full Q-table forward pass.

    x             : [B, input_dim] float32
    kernel_params : output of prepare_dqn_params()[0]
    output_dim    : true number of actions (static)
    Returns [B, output_dim] float32 (HBM store is bf16; upcast on the small slice).
    """
    B, input_dim = x.shape
    hidden = kernel_params["w1t"].shape[1]
    out_pad = kernel_params["w3t"].shape[1]

    tb = _pick_tile(B, batch_tile)
    B_pad = _round_up(B, tb)
    if B_pad != B:
        x = jnp.pad(x, ((0, B_pad - B), (0, 0)))
    grid = (B_pad // tb,)

    flops = 2 * B_pad * (input_dim * hidden + hidden * hidden + hidden * out_pad)
    bytes_accessed = (
        B_pad * input_dim * 4                                            # x (f32)
        + (input_dim * hidden + hidden * hidden + hidden * out_pad) * 2  # weights (bf16)
        + (2 * hidden + out_pad) * 4                                     # biases (f32)
        + B_pad * out_pad * 2                                            # output (bf16)
    )

    out_padded = pl.pallas_call(
        dqn_kernel,
        out_shape=jax.ShapeDtypeStruct((B_pad, out_pad), jnp.bfloat16),
        grid_spec=pltpu.PrefetchScalarGridSpec(
            num_scalar_prefetch=0,
            grid=grid,
            in_specs=_dqn_in_specs(tb, input_dim, hidden, out_pad),
            out_specs=pl.BlockSpec((tb, out_pad), lambda i: (i, 0)),
        ),
        compiler_params=pltpu.CompilerParams(
            dimension_semantics=("parallel",)
        ),
        cost_estimate=pl.CostEstimate(
            flops=flops, transcendentals=0, bytes_accessed=bytes_accessed
        ),
    )(x, kernel_params["w1t"], kernel_params["b1"],
      kernel_params["w2t"], kernel_params["b2"],
      kernel_params["w3t"], kernel_params["b3"])

    return out_padded[:B, :output_dim].astype(jnp.float32)


@functools.partial(jax.jit, static_argnames=("output_dim", "batch_tile"))
def dqn_greedy_action(x, kernel_params, output_dim, batch_tile=1024):
    """Acting path: fused forward + in-kernel argmax -> [B] int32 actions."""
    B, input_dim = x.shape
    hidden = kernel_params["w1t"].shape[1]
    out_pad = kernel_params["w3t"].shape[1]

    tb = _pick_tile(B, batch_tile)
    B_pad = _round_up(B, tb)
    if B_pad != B:
        x = jnp.pad(x, ((0, B_pad - B), (0, 0)))
    grid = (B_pad // tb,)

    acts_padded = pl.pallas_call(
        functools.partial(dqn_act_kernel, output_dim=output_dim),
        out_shape=jax.ShapeDtypeStruct((B_pad, 1), jnp.int32),
        grid_spec=pltpu.PrefetchScalarGridSpec(
            num_scalar_prefetch=0,
            grid=grid,
            in_specs=_dqn_in_specs(tb, input_dim, hidden, out_pad),
            out_specs=pl.BlockSpec((tb, 1), lambda i: (i, 0)),
        ),
        compiler_params=pltpu.CompilerParams(
            dimension_semantics=("parallel",)
        ),
    )(x, kernel_params["w1t"], kernel_params["b1"],
      kernel_params["w2t"], kernel_params["b2"],
      kernel_params["w3t"], kernel_params["b3"])

    return acts_padded[:B, 0]


# ---------------------------------------------------------------------------
# Init / reference
# ---------------------------------------------------------------------------
def init_dqn_params(key, input_dim, output_dim, hidden=128):
    """Deterministic init mirroring nn.Linear's U(-1/sqrt(fan_in), 1/sqrt(fan_in))."""
    ks = jax.random.split(key, 6)

    def linear(kw, kb, fan_in, fan_out):
        bound = 1.0 / jnp.sqrt(jnp.float32(fan_in))
        w = jax.random.uniform(kw, (fan_out, fan_in), jnp.float32, -bound, bound)
        b = jax.random.uniform(kb, (fan_out,), jnp.float32, -bound, bound)
        return w, b

    w1, b1 = linear(ks[0], ks[1], input_dim, hidden)
    w2, b2 = linear(ks[2], ks[3], hidden, hidden)
    w3, b3 = linear(ks[4], ks[5], hidden, output_dim)
    return {"w1": w1, "b1": b1, "w2": w2, "b2": b2, "w3": w3, "b3": b3}


def dqn_reference(x, p):
    """Pure-JAX f32 reference matching the PyTorch forward exactly."""
    h1 = jnp.maximum(x @ p["w1"].T + p["b1"], 0.0)
    h2 = jnp.maximum(h1 @ p["w2"].T + p["b2"], 0.0)
    return h2 @ p["w3"].T + p["b3"]


if __name__ == "__main__":
    key = jax.random.PRNGKey(0)
    k_param, k_x1, k_x2 = jax.random.split(key, 3)

    input_dim, output_dim = 16, 4
    params = init_dqn_params(k_param, input_dim, output_dim)
    kernel_params, out_dim = prepare_dqn_params(params)

    # 1) Tiny batch: single tile, padded 8 -> 16 rows.
    x_small = jax.random.normal(k_x1, (8, input_dim), jnp.float32)
    out_small = jax.block_until_ready(dqn_forward(x_small, kernel_params, out_dim))
    ref_small = dqn_reference(x_small, params)
    assert out_small.shape == (8, output_dim)
    # bf16 matmul + bf16 output store -> looser tolerance vs. f32 reference.
    assert jnp.allclose(out_small, ref_small, atol=5e-2, rtol=5e-2), "mismatch (small)"

    # 2) Non-multiple batch, default (single big tile) path.
    x_big = jax.random.normal(k_x2, (200, input_dim), jnp.float32)
    out_big = jax.block_until_ready(dqn_forward(x_big, kernel_params, out_dim))
    ref_big = dqn_reference(x_big, params)
    assert out_big.shape == (200, output_dim)
    assert jnp.allclose(out_big, ref_big, atol=5e-2, rtol=5e-2), "mismatch (big)"

    # 3) Same batch, small batch_tile override to exercise a multi-step
    #    software-pipelined grid (2 x 128-row tiles).
    out_big2 = jax.block_until_ready(
        dqn_forward(x_big, kernel_params, out_dim, batch_tile=128))
    assert jnp.allclose(out_big2, ref_big, atol=5e-2, rtol=5e-2), "mismatch (tiled)"

    # 4) Fused greedy-action kernel (acting path).
    acts = jax.block_until_ready(dqn_greedy_action(x_big, kernel_params, out_dim))
    assert acts.shape == (200,)
    assert int(acts.min()) >= 0 and int(acts.max()) < output_dim
    # Robust to bf16 near-ties: reference Q at the chosen action must be within
    # tolerance of the reference row max.
    ref_at = jnp.take_along_axis(ref_big, acts[:, None].astype(jnp.int32), axis=1)[:, 0]
    assert bool(jnp.all(ref_at >= ref_big.max(axis=1) - 5e-2)), "mismatch (argmax)"

    print("KERNEL_OK")
</pallas_src>

<mosaic_0001>
module attributes {stable_mosaic.version = 11 : i64} {
  func.func @dqn_kernel(%arg0: i32, %arg1: memref<16x16xf32, #tpu.memory_space<vmem>>, %arg2: memref<16x128xbf16, #tpu.memory_space<vmem>>, %arg3: memref<1x128xf32, #tpu.memory_space<vmem>>, %arg4: memref<128x128xbf16, #tpu.memory_space<vmem>>, %arg5: memref<1x128xf32, #tpu.memory_space<vmem>>, %arg6: memref<128x128xbf16, #tpu.memory_space<vmem>>, %arg7: memref<1x128xf32, #tpu.memory_space<vmem>>, %arg8: memref<16x128xbf16, #tpu.memory_space<vmem>>) attributes {dimension_semantics = [#tpu.dimension_semantics<parallel>], iteration_bounds = array<i64: 1>, scalar_prefetch = 0 : i64, scratch_operands = 0 : i64, tpu.core_type = #tpu.core_type<tc>, window_params = [{transform_indices = @transform_0, window_bounds = array<i64: 16, 16>}, {pipeline_mode = #tpu.pipeline_mode<synchronous>, transform_indices = @transform_1, window_bounds = array<i64: 16, 128>}, {pipeline_mode = #tpu.pipeline_mode<synchronous>, transform_indices = @transform_2, window_bounds = array<i64: 1, 128>}, {pipeline_mode = #tpu.pipeline_mode<synchronous>, transform_indices = @transform_3, window_bounds = array<i64: 128, 128>}, {pipeline_mode = #tpu.pipeline_mode<synchronous>, transform_indices = @transform_4, window_bounds = array<i64: 1, 128>}, {pipeline_mode = #tpu.pipeline_mode<synchronous>, transform_indices = @transform_5, window_bounds = array<i64: 128, 128>}, {pipeline_mode = #tpu.pipeline_mode<synchronous>, transform_indices = @transform_6, window_bounds = array<i64: 1, 128>}, {transform_indices = @transform_7, window_bounds = array<i64: 16, 128>}]} {
    %c0 = arith.constant 0 : index
    %c0_0 = arith.constant 0 : index
    %0 = vector.load %arg1[%c0, %c0_0] : memref<16x16xf32, #tpu.memory_space<vmem>>, vector<16x16xf32>
    %1 = arith.truncf %0 : vector<16x16xf32> to vector<16x16xbf16>
    %c0_1 = arith.constant 0 : index
    %c0_2 = arith.constant 0 : index
    %2 = vector.load %arg2[%c0_1, %c0_2] : memref<16x128xbf16, #tpu.memory_space<vmem>>, vector<16x128xbf16>
    %cst = arith.constant dense<0.000000e+00> : vector<16x128xf32>
    %3 = tpu.matmul %1, %2, %cst {dimension_numbers = #tpu.dot_dimension_numbers<[1], [0], [0], [1], [0, 0, 1, 1], [], []>} : vector<16x16xbf16>, vector<16x128xbf16>, vector<16x128xf32> -> vector<16x128xf32>
    %c0_3 = arith.constant 0 : index
    %c0_4 = arith.constant 0 : index
    %4 = vector.load %arg3[%c0_3, %c0_4] : memref<1x128xf32, #tpu.memory_space<vmem>>, vector<1x128xf32>
    %5 = vector.broadcast %4 : vector<1x128xf32> to vector<16x128xf32>
    %6 = arith.addf %3, %5 : vector<16x128xf32>
    %cst_5 = arith.constant 0.000000e+00 : f32
    %7 = vector.broadcast %cst_5 : f32 to vector<16x128xf32>
    %8 = arith.maximumf %6, %7 : vector<16x128xf32>
    %9 = arith.truncf %8 : vector<16x128xf32> to vector<16x128xbf16>
    %c0_6 = arith.constant 0 : index
    %c0_7 = arith.constant 0 : index
    %10 = vector.load %arg4[%c0_6, %c0_7] : memref<128x128xbf16, #tpu.memory_space<vmem>>, vector<128x128xbf16>
    %cst_8 = arith.constant dense<0.000000e+00> : vector<16x128xf32>
    %11 = tpu.matmul %9, %10, %cst_8 {dimension_numbers = #tpu.dot_dimension_numbers<[1], [0], [0], [1], [0, 0, 1, 1], [], []>} : vector<16x128xbf16>, vector<128x128xbf16>, vector<16x128xf32> -> vector<16x128xf32>
    %c0_9 = arith.constant 0 : index
    %c0_10 = arith.constant 0 : index
    %12 = vector.load %arg5[%c0_9, %c0_10] : memref<1x128xf32, #tpu.memory_space<vmem>>, vector<1x128xf32>
    %13 = vector.broadcast %12 : vector<1x128xf32> to vector<16x128xf32>
    %14 = arith.addf %11, %13 : vector<16x128xf32>
    %cst_11 = arith.constant 0.000000e+00 : f32
    %15 = vector.broadcast %cst_11 : f32 to vector<16x128xf32>
    %16 = arith.maximumf %14, %15 : vector<16x128xf32>
    %17 = arith.truncf %16 : vector<16x128xf32> to vector<16x128xbf16>
    %c0_12 = arith.constant 0 : index
    %c0_13 = arith.constant 0 : index
    %18 = vector.load %arg6[%c0_12, %c0_13] : memref<128x128xbf16, #tpu.memory_space<vmem>>, vector<128x128xbf16>
    %cst_14 = arith.constant dense<0.000000e+00> : vector<16x128xf32>
    %19 = tpu.matmul %17, %18, %cst_14 {dimension_numbers = #tpu.dot_dimension_numbers<[1], [0], [0], [1], [0, 0, 1, 1], [], []>} : vector<16x128xbf16>, vector<128x128xbf16>, vector<16x128xf32> -> vector<16x128xf32>
    %c0_15 = arith.constant 0 : index
    %c0_16 = arith.constant 0 : index
    %20 = vector.load %arg7[%c0_15, %c0_16] : memref<1x128xf32, #tpu.memory_space<vmem>>, vector<1x128xf32>
    %21 = vector.broadcast %20 : vector<1x128xf32> to vector<16x128xf32>
    %22 = arith.addf %19, %21 : vector<16x128xf32>
    %23 = arith.truncf %22 : vector<16x128xf32> to vector<16x128xbf16>
    %c0_17 = arith.constant 0 : index
    %c0_18 = arith.constant 0 : index
    %24 = vector.load %arg8[%c0_17, %c0_18] : memref<16x128xbf16, #tpu.memory_space<vmem>>, vector<16x128xbf16>
    tpu.vector_store %arg8[%c0_17, %c0_18], %23 {strides = array<i32>} : memref<16x128xbf16, #tpu.memory_space<vmem>>, vector<16x128xbf16>,
    return
  }
  func.func @transform_0(%arg0: i32) -> (i32, i32) {
    %c0_i32 = arith.constant 0 : i32
    %c0_i32_0 = arith.constant 0 : i32
    return %arg0, %c0_i32 : i32, i32
  }
  func.func @transform_1(%arg0: i32) -> (i32, i32) {
    %c0_i32 = arith.constant 0 : i32
    %c0_i32_0 = arith.constant 0 : i32
    %c0_i32_1 = arith.constant 0 : i32
    return %c0_i32, %c0_i32_0 : i32, i32
  }
  func.func @transform_2(%arg0: i32) -> (i32, i32) {
    %c0_i32 = arith.constant 0 : i32
    %c0_i32_0 = arith.constant 0 : i32
    %c0_i32_1 = arith.constant 0 : i32
    return %c0_i32, %c0_i32_0 : i32, i32
  }
  func.func @transform_3(%arg0: i32) -> (i32, i32) {
    %c0_i32 = arith.constant 0 : i32
    %c0_i32_0 = arith.constant 0 : i32
    %c0_i32_1 = arith.constant 0 : i32
    return %c0_i32, %c0_i32_0 : i32, i32
  }
  func.func @transform_4(%arg0: i32) -> (i32, i32) {
    %c0_i32 = arith.constant 0 : i32
    %c0_i32_0 = arith.constant 0 : i32
    %c0_i32_1 = arith.constant 0 : i32
    return %c0_i32, %c0_i32_0 : i32, i32
  }
  func.func @transform_5(%arg0: i32) -> (i32, i32) {
    %c0_i32 = arith.constant 0 : i32
    %c0_i32_0 = arith.constant 0 : i32
    %c0_i32_1 = arith.constant 0 : i32
    return %c0_i32, %c0_i32_0 : i32, i32
  }
  func.func @transform_6(%arg0: i32) -> (i32, i32) {
    %c0_i32 = arith.constant 0 : i32
    %c0_i32_0 = arith.constant 0 : i32
    %c0_i32_1 = arith.constant 0 : i32
    return %c0_i32, %c0_i32_0 : i32, i32
  }
  func.func @transform_7(%arg0: i32) -> (i32, i32) {
    %c0_i32 = arith.constant 0 : i32
    %c0_i32_0 = arith.constant 0 : i32
    return %arg0, %c0_i32 : i32, i32
  }
}

</mosaic_0001>

<llo_original>
// kernel: dqn_forward.1
$region0: #{dqn_forward.1}
  #allocation0 [shape = 'u32[]', space=smem, size = 0x4, offset = 0x4, fixed_abs, tag = 'smem constant byte address 0x4 - core index']
  #allocation1 [shape = 'u32[144,128]{1,0:T(1,128)}', space=vmem, size = 0x12000, scoped, tag = 'internal scratch']
  %s0 = inlined_call_operand.vmem [shape: f32[16,16], index: 0, kind: input, shape index: {}]
  %s1 = inlined_call_operand.vmem [shape: bf16[16,128], index: 1, kind: input, shape index: {}]
  %s2 = inlined_call_operand.vmem [shape: f32[1,128], index: 2, kind: input, shape index: {}]
  %s3 = inlined_call_operand.hbm [shape: bf16[128,128], index: 3, kind: input, shape index: {}]
  %s4 = inlined_call_operand.vmem [shape: f32[1,128], index: 4, kind: input, shape index: {}]
  %s5 = inlined_call_operand.hbm [shape: bf16[128,128], index: 5, kind: input, shape index: {}]
  %s6 = inlined_call_operand.vmem [shape: f32[1,128], index: 6, kind: input, shape index: {}]
  %s7 = inlined_call_operand.vmem [shape: bf16[16,128], index: 7, kind: output, shape index: {}]
  %s8 = sld [smem:[#allocation0]]
  $region46: #{dqn_forward.1} parent=0
    _
  %s10 = ssub.s32 1, %s8
  %s11 = scalar_select 0, %s10, %s8
  $region1: #{dqn_forward.1} parent=0
    #allocation2 [shape = 'u8[32768]{0}', space=vmem, size = 0x8000, scoped, tag = 'input window, operand 3, single buffered']
    #allocation3 [shape = 's32[1]{0}', space=sflag, size = 0x4, scoped, tag = 'scoped memory for dqn_forward.1']
    #allocation4 [shape = 'u8[32768]{0}', space=vmem, size = 0x8000, scoped, tag = 'input window, operand 5, single buffered']
    #allocation5 [shape = 's32[1]{0}', space=sflag, size = 0x4, scoped, tag = 'scoped memory for dqn_forward.1']
    %12 = vsyncpa [#allocation3], 0
    %13 = vsyncpa [#allocation5], 0
    // Predicated region
    $region2: #{dqn_forward.1} parent=1 // pred_check
      _
    $region3: #{dqn_forward.1} parent=1 // pred_check_branch
      %15 = sbr.rel (0) target = $region5
    $region4: #{dqn_forward.1} parent=1 // pred_region
      _
    $region5: #{dqn_forward.1} parent=1 // pred_fallthru
      _
    // Predicated region
    $region6: #{dqn_forward.1} parent=1 // pred_check
      _
    $region7: #{dqn_forward.1} parent=1 // pred_check_branch
      %17 = sbr.rel (0) target = $region9
    $region8: #{dqn_forward.1} parent=1 // pred_region
      _
    $region9: #{dqn_forward.1} parent=1 // pred_fallthru
      _
    // Predicated region
    $region10: #{dqn_forward.1} parent=1 // pred_check
      _
    $region11: #{dqn_forward.1} parent=1 // pred_check_branch
      %19 = sbr.rel (0) target = $region13
    $region12: #{dqn_forward.1} parent=1 // pred_region
      _
    $region13: #{dqn_forward.1} parent=1 // pred_fallthru
      _
    // Predicated region
    $region14: #{dqn_forward.1} parent=1 // pred_check
      _
    $region15: #{dqn_forward.1} parent=1 // pred_check_branch
      %21 = sbr.rel (0) target = $region17
    $region16: #{dqn_forward.1} parent=1 // pred_region
      %s23 = ssub.s32 1024, 1024
      %24 = vsyncadd [#allocation3], %s23
      %s25 = sshll.u32 [#allocation2], 4
      %s26 = int_to_ptr.vmem [resolvable:$true] %s25
      %31 = dma.hbm_to_vmem [thread:$0]  %s3, 1024, %s26, [#allocation3], 64, 64, 4
    $region17: #{dqn_forward.1} parent=1 // pred_fallthru
      _
    // Predicated region
    $region18: #{dqn_forward.1} parent=1 // pred_check
      _
    $region19: #{dqn_forward.1} parent=1 // pred_check_branch
      %33 = sbr.rel (0) target = $region21
    $region20: #{dqn_forward.1} parent=1 // pred_region
      _
    $region21: #{dqn_forward.1} parent=1 // pred_fallthru
      _
    // Predicated region
    $region22: #{dqn_forward.1} parent=1 // pred_check
      _
    $region23: #{dqn_forward.1} parent=1 // pred_check_branch
      %35 = sbr.rel (0) target = $region25
    $region24: #{dqn_forward.1} parent=1 // pred_region
      %s37 = ssub.s32 1024, 1024
      %38 = vsyncadd [#allocation5], %s37
      %s39 = sshll.u32 [#allocation4], 4
      %s40 = int_to_ptr.vmem [resolvable:$true] %s39
      %45 = dma.hbm_to_vmem [thread:$0]  %s5, 1024, %s40, [#allocation5], 64, 64, 4
    $region25: #{dqn_forward.1} parent=1 // pred_fallthru
      _
    // Predicated region
    $region26: #{dqn_forward.1} parent=1 // pred_check
      _
    $region27: #{dqn_forward.1} parent=1 // pred_check_branch
      %47 = sbr.rel (0) target = $region29
    $region28: #{dqn_forward.1} parent=1 // pred_region
      _
    $region29: #{dqn_forward.1} parent=1 // pred_fallthru
      _
    // Predicated region
    $region30: #{dqn_forward.1} parent=1 // pred_check
      _
    $region31: #{dqn_forward.1} parent=1 // pred_check_branch
      %49 = sbr.rel (0) target = $region33
    $region32: #{dqn_forward.1} parent=1 // pred_region
      %50 = dma.done [#allocation3], 1024
    $region33: #{dqn_forward.1} parent=1 // pred_fallthru
      _
    // Predicated region
    $region34: #{dqn_forward.1} parent=1 // pred_check
      _
    $region35: #{dqn_forward.1} parent=1 // pred_check_branch
      %52 = sbr.rel (0) target = $region37
    $region36: #{dqn_forward.1} parent=1 // pred_region
      %53 = dma.done [#allocation5], 1024
    $region37: #{dqn_forward.1} parent=1 // pred_fallthru
      _
    %v55 = vld [vmem:[%s0] sm:$0xff]
    %v56 = vld [vmem:[%s0 + $0x8] sm:$0xff]
    %v57 = vpack.c.bf16 %v56, %v55
    %v58 = vld [vmem:[%s1] sm:$0xf]
    %v59 = vld [vmem:[%s1 + $0x4] sm:$0xf]
    %v60 = vld [vmem:[%s2] sm:$0x1]
    %v62 = vlaneseq
    %v63 = vshrl.u32 %v62, 7
    %v64 = vsub.s32 0, %v63
    %v65 = vrot.slane %v60, %v64
    %v69 = vunpack.c.l.b16 %v58
    %v70 = vunpack.c.l.b16 %v59
    %v71 = vpack.c.b16 %v70, %v69
    %vm73 = vcmask 130048
    %v75 = vsel %vm73, %v57, 0
    %77 = vmatprep.subr.bf16.mxu0 0
    %78 = vmatpush1.bf16.msra.mxu0 %v71
    %79 = vmatprep.subr.bf16.mxu0 0
    %80 = vmatpush1.bf16.msra.mxu0 0
    %81 = vmatprep.subr.bf16.mxu0 0
    %82 = vmatpush1.bf16.msra.mxu0 0
    %83 = vmatprep.subr.bf16.mxu0 0
    %84 = vmatpush1.bf16.msra.mxu0 0
    %85 = vmatprep.subr.bf16.mxu0 0
    %86 = vmatpush1.bf16.msra.mxu0 0
    %87 = vmatprep.subr.bf16.mxu0 0
    %88 = vmatpush1.bf16.msra.mxu0 0
    %89 = vmatprep.subr.bf16.mxu0 0
    %90 = vmatpush1.bf16.msra.mxu0 0
    %91 = vmatprep.subr.bf16.mxu0 0
    %92 = vmatpush1.bf16.msra.mxu0 0
    %93 = vmatprep.subr.bf16.mxu0 0
    %94 = vmatpush1.bf16.msra.mxu0 0
    %95 = vmatprep.subr.bf16.mxu0 0
    %96 = vmatpush1.bf16.msra.mxu0 0
    %97 = vmatprep.subr.bf16.mxu0 0
    %98 = vmatpush1.bf16.msra.mxu0 0
    %99 = vmatprep.subr.bf16.mxu0 0
    %100 = vmatpush1.bf16.msra.mxu0 0
    %101 = vmatprep.subr.bf16.mxu0 0
    %102 = vmatpush1.bf16.msra.mxu0 0
    %103 = vmatprep.subr.bf16.mxu0 0
    %104 = vmatpush1.bf16.msra.mxu0 0
    %105 = vmatprep.subr.bf16.mxu0 0
    %106 = vmatpush1.bf16.msra.mxu0 0
    %107 = vmatprep.subr.bf16.mxu0 0
    %108 = vmatpush1.bf16.msra.mxu0 0
    %109 = vmatprep.mubr.bf16.mxu0 0
    %110 = vmatmul.mubr.bf16.gmra.mrb[0].mxu0 %v75
    %v111 = vpop.f32.mrb[0].mxu0
    %v112 = vadd.f32 %v65, %v111
    %v113 = vpop.f32.mrb[0].mxu0
    %v114 = vpop.f32.mrb[0].mxu0
    %v115 = vadd.f32 %v65, %v114
    %v116 = vpop.f32.mrb[0].mxu0
    %117 = vdwg.mxu0
    %v118 = vmax.f32 %v112, 0.0
    %v119 = vmax.f32 %v115, 0.0
    %v120 = vpack.c.bf16 %v119, %v118
    %v121 = vld [vmem:[#allocation2] sm:$0xf]
    %v122 = vld [vmem:[#allocation2 + $0x4] sm:$0xf]
    %v123 = vld [vmem:[#allocation2 + $0x8] sm:$0xf]
    %v124 = vld [vmem:[#allocation2 + $0xc] sm:$0xf]
    %v125 = vld [vmem:[#allocation2 + $0x10] sm:$0xf]
    %v126 = vld [vmem:[#allocation2 + $0x14] sm:$0xf]
    %v127 = vld [vmem:[#allocation2 + $0x18] sm:$0xf]
    %v128 = vld [vmem:[#allocation2 + $0x1c] sm:$0xf]
    %v129 = vld [vmem:[#allocation2 + $0x20] sm:$0xf]
    %v130 = vld [vmem:[#allocation2 + $0x24] sm:$0xf]
    %v131 = vld [vmem:[#allocation2 + $0x28] sm:$0xf]
    %v132 = vld [vmem:[#allocation2 + $0x2c] sm:$0xf]
    %v133 = vld [vmem:[#allocation2 + $0x30] sm:$0xf]
    %v134 = vld [vmem:[#allocation2 + $0x34] sm:$0xf]
    %v135 = vld [vmem:[#allocation2 + $0x38] sm:$0xf]
    %v136 = vld [vmem:[#allocation2 + $0x3c] sm:$0xf]
    %v137 = vld [vmem:[%s4] sm:$0x1]
    %v139 = vlaneseq
    %v140 = vshrl.u32 %v139, 7
    %v141 = vsub.s32 0, %v140
    %v142 = vrot.slane %v137, %v141
    %v160 = vunpack.c.l.b16 %v121
    %v161 = vunpack.c.l.b16 %v122
    %v162 = vunpack.c.l.b16 %v123
    %v163 = vunpack.c.l.b16 %v124
    %v164 = vunpack.c.l.b16 %v125
    %v165 = vunpack.c.l.b16 %v126
    %v166 = vunpack.c.l.b16 %v127
    %v167 = vunpack.c.l.b16 %v128
    %v168 = vunpack.c.l.b16 %v129
    %v169 = vunpack.c.l.b16 %v130
    %v170 = vunpack.c.l.b16 %v131
    %v171 = vunpack.c.l.b16 %v132
    %v172 = vunpack.c.l.b16 %v133
    %v173 = vunpack.c.l.b16 %v134
    %v174 = vunpack.c.l.b16 %v135
    %v175 = vunpack.c.l.b16 %v136
    %v176 = vpack.c.b16 %v161, %v160
    %v177 = vpack.c.b16 %v163, %v162
    %v178 = vpack.c.b16 %v165, %v164
    %v179 = vpack.c.b16 %v167, %v166
    %v180 = vpack.c.b16 %v169, %v168
    %v181 = vpack.c.b16 %v171, %v170
    %v182 = vpack.c.b16 %v173, %v172
    %v183 = vpack.c.b16 %v175, %v174
    %192 = vmatprep.subr.bf16.mxu0 0
    %193 = vmatpush1.bf16.msra.mxu0 %v176
    %194 = vmatprep.subr.bf16.mxu0 0
    %195 = vmatpush1.bf16.msra.mxu0 %v177
    %196 = vmatprep.subr.bf16.mxu0 0
    %197 = vmatpush1.bf16.msra.mxu0 %v178
    %198 = vmatprep.subr.bf16.mxu0 0
    %199 = vmatpush1.bf16.msra.mxu0 %v179
    %200 = vmatprep.subr.bf16.mxu0 0
    %201 = vmatpush1.bf16.msra.mxu0 %v180
    %202 = vmatprep.subr.bf16.mxu0 0
    %203 = vmatpush1.bf16.msra.mxu0 %v181
    %204 = vmatprep.subr.bf16.mxu0 0
    %205 = vmatpush1.bf16.msra.mxu0 %v182
    %206 = vmatprep.subr.bf16.mxu0 0
    %207 = vmatpush1.bf16.msra.mxu0 %v183
    %208 = vmatprep.subr.bf16.mxu0 0
    %209 = vmatpush1.bf16.msra.mxu0 0
    %210 = vmatprep.subr.bf16.mxu0 0
    %211 = vmatpush1.bf16.msra.mxu0 0
    %212 = vmatprep.subr.bf16.mxu0 0
    %213 = vmatpush1.bf16.msra.mxu0 0
    %214 = vmatprep.subr.bf16.mxu0 0
    %215 = vmatpush1.bf16.msra.mxu0 0
    %216 = vmatprep.subr.bf16.mxu0 0
    %217 = vmatpush1.bf16.msra.mxu0 0
    %218 = vmatprep.subr.bf16.mxu0 0
    %219 = vmatpush1.bf16.msra.mxu0 0
    %220 = vmatprep.subr.bf16.mxu0 0
    %221 = vmatpush1.bf16.msra.mxu0 0
    %222 = vmatprep.subr.bf16.mxu0 0
    %223 = vmatpush1.bf16.msra.mxu0 0
    %224 = vmatprep.mubr.bf16.mxu0 0
    %225 = vmatmul.mubr.bf16.gmra.mrb[0].mxu0 %v120
    %v226 = vpop.f32.mrb[0].mxu0
    %v227 = vadd.f32 %v142, %v226
    %v228 = vpop.f32.mrb[0].mxu0
    %v229 = vpop.f32.mrb[0].mxu0
    %v230 = vadd.f32 %v142, %v229
    %v231 = vpop.f32.mrb[0].mxu0
    %232 = vdwg.mxu0
    %v233 = vmax.f32 %v227, 0.0
    %v234 = vmax.f32 %v230, 0.0
    %v235 = vpack.c.bf16 %v234, %v233
    %v236 = vld [vmem:[#allocation4] sm:$0xf]
    %v237 = vld [vmem:[#allocation4 + $0x4] sm:$0xf]
    %v238 = vld [vmem:[#allocation4 + $0x8] sm:$0xf]
    %v239 = vld [vmem:[#allocation4 + $0xc] sm:$0xf]
    %v240 = vld [vmem:[#allocation4 + $0x10] sm:$0xf]
    %v241 = vld [vmem:[#allocation4 + $0x14] sm:$0xf]
    %v242 = vld [vmem:[#allocation4 + $0x18] sm:$0xf]
    %v243 = vld [vmem:[#allocation4 + $0x1c] sm:$0xf]
    %v244 = vld [vmem:[#allocation4 + $0x20] sm:$0xf]
    %v245 = vld [vmem:[#allocation4 + $0x24] sm:$0xf]
    %v246 = vld [vmem:[#allocation4 + $0x28] sm:$0xf]
    %v247 = vld [vmem:[#allocation4 + $0x2c] sm:$0xf]
    %v248 = vld [vmem:[#allocation4 + $0x30] sm:$0xf]
    %v249 = vld [vmem:[#allocation4 + $0x34] sm:$0xf]
    %v250 = vld [vmem:[#allocation4 + $0x38] sm:$0xf]
    %v251 = vld [vmem:[#allocation4 + $0x3c] sm:$0xf]
    %v252 = vld [vmem:[%s6] sm:$0x1]
    %v254 = vlaneseq
    %v255 = vshrl.u32 %v254, 7
    %v256 = vsub.s32 0, %v255
    %v257 = vrot.slane %v252, %v256
    %v275 = vunpack.c.l.b16 %v236
    %v276 = vunpack.c.l.b16 %v237
    %v277 = vunpack.c.l.b16 %v238
    %v278 = vunpack.c.l.b16 %v239
    %v279 = vunpack.c.l.b16 %v240
    %v280 = vunpack.c.l.b16 %v241
    %v281 = vunpack.c.l.b16 %v242
    %v282 = vunpack.c.l.b16 %v243
    %v283 = vunpack.c.l.b16 %v244
    %v284 = vunpack.c.l.b16 %v245
    %v285 = vunpack.c.l.b16 %v246
    %v286 = vunpack.c.l.b16 %v247
    %v287 = vunpack.c.l.b16 %v248
    %v288 = vunpack.c.l.b16 %v249
    %v289 = vunpack.c.l.b16 %v250
    %v290 = vunpack.c.l.b16 %v251
    %v291 = vpack.c.b16 %v276, %v275
    %v292 = vpack.c.b16 %v278, %v277
    %v293 = vpack.c.b16 %v280, %v279
    %v294 = vpack.c.b16 %v282, %v281
    %v295 = vpack.c.b16 %v284, %v283
    %v296 = vpack.c.b16 %v286, %v285
    %v297 = vpack.c.b16 %v288, %v287
    %v298 = vpack.c.b16 %v290, %v289
    %307 = vmatprep.subr.bf16.mxu0 0
    %308 = vmatpush1.bf16.msra.mxu0 %v291
    %309 = vmatprep.subr.bf16.mxu0 0
    %310 = vmatpush1.bf16.msra.mxu0 %v292
    %311 = vmatprep.subr.bf16.mxu0 0
    %312 = vmatpush1.bf16.msra.mxu0 %v293
    %313 = vmatprep.subr.bf16.mxu0 0
    %314 = vmatpush1.bf16.msra.mxu0 %v294
    %315 = vmatprep.subr.bf16.mxu0 0
    %316 = vmatpush1.bf16.msra.mxu0 %v295
    %317 = vmatprep.subr.bf16.mxu0 0
    %318 = vmatpush1.bf16.msra.mxu0 %v296
    %319 = vmatprep.subr.bf16.mxu0 0
    %320 = vmatpush1.bf16.msra.mxu0 %v297
    %321 = vmatprep.subr.bf16.mxu0 0
    %322 = vmatpush1.bf16.msra.mxu0 %v298
    %323 = vmatprep.subr.bf16.mxu0 0
    %324 = vmatpush1.bf16.msra.mxu0 0
    %325 = vmatprep.subr.bf16.mxu0 0
    %326 = vmatpush1.bf16.msra.mxu0 0
    %327 = vmatprep.subr.bf16.mxu0 0
    %328 = vmatpush1.bf16.msra.mxu0 0
    %329 = vmatprep.subr.bf16.mxu0 0
    %330 = vmatpush1.bf16.msra.mxu0 0
    %331 = vmatprep.subr.bf16.mxu0 0
    %332 = vmatpush1.bf16.msra.mxu0 0
    %333 = vmatprep.subr.bf16.mxu0 0
    %334 = vmatpush1.bf16.msra.mxu0 0
    %335 = vmatprep.subr.bf16.mxu0 0
    %336 = vmatpush1.bf16.msra.mxu0 0
    %337 = vmatprep.subr.bf16.mxu0 0
    %338 = vmatpush1.bf16.msra.mxu0 0
    %339 = vmatprep.mubr.bf16.mxu0 0
    %340 = vmatmul.mubr.bf16.gmra.mrb[0].mxu0 %v235
    %v341 = vpop.f32.mrb[0].mxu0
    %v342 = vadd.f32 %v257, %v341
    %v343 = vpop.f32.mrb[0].mxu0
    %v344 = vpop.f32.mrb[0].mxu0
    %v345 = vadd.f32 %v257, %v344
    %v346 = vpop.f32.mrb[0].mxu0
    %347 = vdwg.mxu0
    %v348 = vpack.c.bf16 %v345, %v342
    %v350 = vunpack.c.l.b16 %v348
    %v351 = vunpack.c.h.b16 %v348
    %v352 = vpack.c.b16 %v350, %v350
    %v353 = vpack.c.b16 %v351, %v351
    %356 = vst [vmem:[%s7] sm:$0xf] %v352
    %357 = vst [vmem:[%s7 + $0x4] sm:$0xf] %v353
    // Predicated region
    $region38: #{dqn_forward.1} parent=1 // pred_check
      _
    $region39: #{dqn_forward.1} parent=1 // pred_check_branch
      %359 = sbr.rel (0) target = $region41
    $region40: #{dqn_forward.1} parent=1 // pred_region
      _
    $region41: #{dqn_forward.1} parent=1 // pred_fallthru
      _
    // Predicated region
    $region42: #{dqn_forward.1} parent=1 // pred_check
      _
    $region43: #{dqn_forward.1} parent=1 // pred_check_branch
      %361 = sbr.rel (0) target = $region45
    $region44: #{dqn_forward.1} parent=1 // pred_region
      _
    $region45: #{dqn_forward.1} parent=1 // pred_fallthru
      _
    %362 = vsyncpa [#allocation3], 1
    %363 = vsyncpa [#allocation5], 1

</llo_original>
